<compile_context>
chip_gen: v7x
topology: tpu7x:2x2x1
jax: 0.10.0
libtpu: 0.0.40
codegen_flags: <defaults>
</compile_context>

<pallas_src>
import jax
import jax.numpy as jnp
from jax.experimental import pallas as pl
from jax.experimental.pallas import tpu as pltpu

_LANE = 128  # vreg lane width


def _tanh_kernel(x_ref, o_ref):
    o_ref[...] = jnp.tanh(x_ref[...])


def _target_block_bytes() -> int:
    """~4 MiB blocks by default; ~8 MiB on v7x-class parts (3.2 TB/s HBM)."""
    try:
        kind = jax.devices()[0].device_kind.lower()
    except Exception:
        kind = ""
    if "v7" in kind or "tpu7" in kind:
        return 8 * 1024 * 1024
    return 4 * 1024 * 1024


def _tanh_2d(x2d: jax.Array) -> jax.Array:
    """Run the tanh kernel on a lane-dense (rows, cols) slab."""
    rows, cols = x2d.shape
    dtype = x2d.dtype
    itemsize = jnp.dtype(dtype).itemsize
    # Derive sublane granularity from dtype (8 for f32, 16 for bf16, 32 for i8).
    sublane = max(8, 32 // itemsize)

    # Row tiling: biggest block <= target that is sublane-aligned.
    target = _target_block_bytes()
    tile_r = (target // (cols * itemsize)) // sublane * sublane
    tile_r = max(sublane, tile_r)
    if tile_r >= rows:
        tile_r = rows  # single full-extent block (always a legal block shape)
    grid = (pl.cdiv(rows, tile_r),)

    # VMEM: 2 input + 2 output double-buffered blocks, plus headroom.
    block_bytes = tile_r * cols * itemsize
    vmem_limit = max(16 * 1024 * 1024,
                     min(4 * block_bytes + 8 * 1024 * 1024, 48 * 1024 * 1024))

    n = rows * cols
    return pl.pallas_call(
        _tanh_kernel,
        out_shape=jax.ShapeDtypeStruct((rows, cols), dtype),
        grid=grid,
        in_specs=[pl.BlockSpec((tile_r, cols), lambda i: (i, 0))],
        out_specs=pl.BlockSpec((tile_r, cols), lambda i: (i, 0)),
        compiler_params=pltpu.CompilerParams(
            dimension_semantics=("parallel",),
            vmem_limit_bytes=vmem_limit,
        ),
        cost_estimate=pl.CostEstimate(
            flops=0,
            transcendentals=n,
            bytes_accessed=2 * n * itemsize,
        ),
    )(x2d)


def pallas_tanh(x: jax.Array) -> jax.Array:
    """Elementwise tanh (net_Tanh forward) via a Pallas TPU kernel."""
    orig_shape = x.shape
    n = x.size
    if n == 0:
        return x

    # --- lane-dense 2D slab: widest copy-free lane width -------------------
    cols = None
    for cand in (1024, 512, 256, _LANE):
        if n % cand == 0:
            cols = cand
            break

    if cols is not None:
        out2d = _tanh_2d(x.reshape(n // cols, cols))
        return out2d.reshape(orig_shape)

    # --- unaligned fallback: aligned prefix via Pallas, tiny tail via XLA ---
    x_flat = x.reshape(-1)
    n_aligned = (n // _LANE) * _LANE
    if n_aligned == 0:
        # Fewer than 128 elements: a single full-extent (1, n) block is legal.
        out2d = _tanh_2d(x_flat.reshape(1, n))
        return out2d.reshape(orig_shape)

    prefix = _tanh_2d(x_flat[:n_aligned].reshape(n_aligned // _LANE, _LANE))
    tail = jnp.tanh(x_flat[n_aligned:])  # < 128 elements
    return jnp.concatenate([prefix.reshape(-1), tail]).reshape(orig_shape)


if __name__ == "__main__":
    key = jax.random.PRNGKey(0)

    # Rank-4 f32 input (NCHW), consistent with Tanh_F32_R4.
    x = jax.random.normal(key, (2, 4, 16, 16), dtype=jnp.float32)
    y = pallas_tanh(x)
    jax.block_until_ready(y)
    y_ref = jnp.tanh(x)
    assert y.shape == x.shape and y.dtype == x.dtype
    assert jnp.allclose(y, y_ref, atol=1e-6, rtol=1e-6)

    # Unaligned (prefix + tail) path with an awkward rank-4 shape.
    x_odd = jax.random.normal(jax.random.PRNGKey(1), (3, 5, 7, 2), dtype=jnp.float32)
    y_odd = pallas_tanh(x_odd)
    jax.block_until_ready(y_odd)
    assert y_odd.shape == x_odd.shape and y_odd.dtype == x_odd.dtype
    assert jnp.allclose(y_odd, jnp.tanh(x_odd), atol=1e-6, rtol=1e-6)

    # Tiny (< 128 element) path.
    x_tiny = jax.random.normal(jax.random.PRNGKey(2), (1, 2, 3, 5), dtype=jnp.float32)
    y_tiny = pallas_tanh(x_tiny)
    jax.block_until_ready(y_tiny)
    assert jnp.allclose(y_tiny, jnp.tanh(x_tiny), atol=1e-6, rtol=1e-6)

    print("KERNEL_OK")
</pallas_src>

<mosaic_0001>
module attributes {stable_mosaic.version = 11 : i64} {
  func.func @_tanh_kernel(%arg0: i32, %arg1: memref<2x1024xf32, #tpu.memory_space<vmem>>, %arg2: memref<2x1024xf32, #tpu.memory_space<vmem>>) attributes {dimension_semantics = [#tpu.dimension_semantics<parallel>], iteration_bounds = array<i64: 1>, scalar_prefetch = 0 : i64, scratch_operands = 0 : i64, tpu.core_type = #tpu.core_type<tc>, window_params = [{transform_indices = @transform_0, window_bounds = array<i64: 2, 1024>}, {transform_indices = @transform_1, window_bounds = array<i64: 2, 1024>}]} {
    %c0 = arith.constant 0 : index
    %c0_0 = arith.constant 0 : index
    %0 = vector.load %arg1[%c0, %c0_0] : memref<2x1024xf32, #tpu.memory_space<vmem>>, vector<2x1024xf32>
    %1 = math.tanh %0 : vector<2x1024xf32>
    %c0_1 = arith.constant 0 : index
    %c0_2 = arith.constant 0 : index
    %2 = vector.load %arg2[%c0_1, %c0_2] : memref<2x1024xf32, #tpu.memory_space<vmem>>, vector<2x1024xf32>
    tpu.vector_store %arg2[%c0_1, %c0_2], %1 {strides = array<i32>} : memref<2x1024xf32, #tpu.memory_space<vmem>>, vector<2x1024xf32>,
    return
  }
  func.func @transform_0(%arg0: i32) -> (i32, i32) {
    %c0_i32 = arith.constant 0 : i32
    %c0_i32_0 = arith.constant 0 : i32
    return %arg0, %c0_i32 : i32, i32
  }
  func.func @transform_1(%arg0: i32) -> (i32, i32) {
    %c0_i32 = arith.constant 0 : i32
    %c0_i32_0 = arith.constant 0 : i32
    return %arg0, %c0_i32 : i32, i32
  }
}

</mosaic_0001>

<llo_original>
// kernel: tpu_custom_call.1
$region0: #{tpu_custom_call.1}
  #allocation0 [shape = 'u32[]', space=smem, size = 0x4, offset = 0x4, fixed_abs, tag = 'smem constant byte address 0x4 - core index']
  #allocation1 [shape = 'u32[144,128]{1,0:T(1,128)}', space=vmem, size = 0x12000, scoped, tag = 'internal scratch']
  %s0 = inlined_call_operand.hbm [shape: f32[2,1024], index: 0, kind: input, shape index: {}]
  %s1 = inlined_call_operand.hbm [shape: f32[2,1024], index: 1, kind: output, shape index: {}]
  %s2 = sld [smem:[#allocation0]]
  $region18: #{tpu_custom_call.1} parent=0
    _
  %s4 = ssub.s32 1, %s2
  %s5 = scalar_select 0, %s4, %s2
  $region1: #{tpu_custom_call.1} parent=0
    #allocation2 [shape = 'u8[8192]{0}', space=vmem, size = 0x2000, scoped, tag = 'input window, operand 0, single buffered']
    #allocation3 [shape = 's32[1]{0}', space=sflag, size = 0x4, scoped, tag = 'scoped memory for tpu_custom_call.1']
    #allocation4 [shape = 's32[1]{0}', space=sflag, size = 0x4, scoped, tag = 'scoped memory for tpu_custom_call.1']
    #allocation5 [shape = 'u8[8192]{0}', space=vmem, size = 0x2000, scoped, tag = 'output window, operand 0, single buffered']
    %6 = vsyncpa [#allocation3], 0
    %7 = vsyncpa [#allocation4], 0
    // Predicated region
    $region2: #{tpu_custom_call.1} parent=1 // pred_check
      _
    $region3: #{tpu_custom_call.1} parent=1 // pred_check_branch
      %9 = sbr.rel (0) target = $region5
    $region4: #{tpu_custom_call.1} parent=1 // pred_region
      %s11 = ssub.s32 256, 256
      %12 = vsyncadd [#allocation3], %s11
      %s14 = sshll.u32 [#allocation2], 4
      %s15 = int_to_ptr.vmem [resolvable:$true] %s14
      %17 = dma.hbm_to_vmem [thread:$0]  %s0, 256, %s15, [#allocation3]
    $region5: #{tpu_custom_call.1} parent=1 // pred_fallthru
      _
    // Predicated region
    $region6: #{tpu_custom_call.1} parent=1 // pred_check
      _
    $region7: #{tpu_custom_call.1} parent=1 // pred_check_branch
      %19 = sbr.rel (0) target = $region9
    $region8: #{tpu_custom_call.1} parent=1 // pred_region
      %20 = dma.done [#allocation3], 256
    $region9: #{tpu_custom_call.1} parent=1 // pred_fallthru
      _
    %v21 = vld [vmem:[#allocation2] sm:$0xff]
    %v22 = vld [vmem:[#allocation2 + $0x8] sm:$0xff]
    %v23 = vtanh.pop %v21
    %v24 = vtanh.pop %v22
    %25 = vst [vmem:[#allocation5] sm:$0xff] %v23
    %26 = vst [vmem:[#allocation5 + $0x8] sm:$0xff] %v24
    // Predicated region
    $region10: #{tpu_custom_call.1} parent=1 // pred_check
      _
    $region11: #{tpu_custom_call.1} parent=1 // pred_check_branch
      %28 = sbr.rel (0) target = $region13
    $region12: #{tpu_custom_call.1} parent=1 // pred_region
      %s30 = ssub.s32 256, 256
      %31 = vsyncadd [#allocation4], %s30
      %s33 = sshll.u32 [#allocation5], 4
      %s34 = int_to_ptr.vmem [resolvable:$true] %s33
      %36 = dma.vmem_to_hbm [thread:$0]  %s34, 256, %s1, [#allocation4]
    $region13: #{tpu_custom_call.1} parent=1 // pred_fallthru
      _
    // Predicated region
    $region14: #{tpu_custom_call.1} parent=1 // pred_check
      _
    $region15: #{tpu_custom_call.1} parent=1 // pred_check_branch
      %38 = sbr.rel (0) target = $region17
    $region16: #{tpu_custom_call.1} parent=1 // pred_region
      %39 = dma.done [#allocation4], 256
    $region17: #{tpu_custom_call.1} parent=1 // pred_fallthru
      _
    %40 = vsyncpa [#allocation3], 1
    %41 = vsyncpa [#allocation4], 1

</llo_original>
